<compile_context>
chip_gen: v7x
topology: tpu7x:2x2x1
jax: 0.10.0
libtpu: 0.0.40
codegen_flags: <defaults>
</compile_context>

<pallas_src>
import functools

import jax
import jax.numpy as jnp
from jax import lax
from jax.experimental import pallas as pl
from jax.experimental.pallas import tpu as pltpu


def _seg_merge_kernel(x_ref, w_ref, b_ref, o_ref, *, eps):
    # x_ref: (TM, D) merged-segment rows
    # w_ref: (D, d_model) = gamma[:, None] * W^T  (LayerNorm scale folded in)
    # b_ref: (1, d_model) = beta @ W^T + b        (LayerNorm shift folded in, f32)
    x = x_ref[...]
    if x.dtype != jnp.float32:
        x = x.astype(jnp.float32)

    # LayerNorm statistics over the last (feature) dim, biased variance
    # (PyTorch semantics).  Kept in f32 (v5e has no bf16 VPU path).
    mean = jnp.mean(x, axis=-1, keepdims=True)
    centered = x - mean
    var = jnp.mean(centered * centered, axis=-1, keepdims=True)
    x_hat = centered * lax.rsqrt(var + eps)

    # Feed the MXU at the weight's native dtype (bf16 stays bf16); accumulate f32.
    out = jnp.dot(x_hat.astype(w_ref.dtype), w_ref[...],
                  preferred_element_type=jnp.float32)
    out = out + b_ref[...]
    o_ref[...] = out.astype(o_ref.dtype)


_ROW_TILE_CAP = 512            # 256-512 sweet spot across v5e/v6e/v7x
_VMEM_TILE_BUDGET = 16 * 1024 * 1024   # pipeline-buffer budget (fits v7x's smaller VMEM)


def _pick_row_tile(rows, D, d_model, x_bytes, w_bytes):
    """Largest row tile (multiple of 8, <= cap) whose pipeline buffers fit the budget."""
    if rows <= 8:
        return max(rows, 1)
    # Grid-invariant operands (double-buffered by default) + per-row cost:
    # double-buffered input tile, double-buffered output tile, f32 working copies.
    const = 2 * (D * d_model * w_bytes + d_model * 4)
    per_row = 2 * D * x_bytes + 2 * d_model * x_bytes + 4 * (2 * D + d_model)
    tm = (_VMEM_TILE_BUDGET - const) // max(per_row, 1)
    tm = min(int(tm), _ROW_TILE_CAP, rows)
    if tm >= rows:
        return rows            # single full-extent block (no divisibility constraint)
    return max(8, (tm // 8) * 8)


def seg_merging_new(x, params, *, win_size, eps=1e-5, row_tile=None):
    """x: (B, ts_d, L, d_model) -> (B, ts_d, L // win_size, d_model)."""
    B, ts_d, L, d_model = x.shape
    assert L % win_size == 0, "L must be divisible by win_size"
    seg_num = L // win_size
    D = win_size * d_model

    gamma, beta, w, b = params
    assert gamma.shape == (D,) and beta.shape == (D,)
    assert w.shape == (d_model, D) and b.shape == (d_model,)

    # 'b t (s w) d -> b t s (w d)' is a pure reshape; flatten rows for the kernel.
    rows = B * ts_d * seg_num
    x2 = x.reshape(rows, D)

    # Fold the LayerNorm affine into the Linear (done once in the wrapper).
    w_t32 = w.T.astype(jnp.float32)                               # (D, d_model)
    w_fold = (gamma.astype(jnp.float32)[:, None] * w_t32).astype(w.dtype)
    b_fold = (beta.astype(jnp.float32) @ w_t32
              + b.astype(jnp.float32)).reshape(1, d_model)        # stays f32

    if row_tile is None:
        tm = _pick_row_tile(rows, D, d_model,
                            jnp.dtype(x.dtype).itemsize,
                            jnp.dtype(w.dtype).itemsize)
    else:
        tm = min(int(row_tile), rows)
        if tm < rows:
            tm = max(8, (tm // 8) * 8)

    grid = (pl.cdiv(rows, tm),)   # ragged last block handled by Pallas (no pad/slice)

    # Note: when d_model < 128 the output stores are lane-masked; typical
    # Crossformer d_model (>=128) gives lane-dense stores for free.
    out2 = pl.pallas_call(
        functools.partial(_seg_merge_kernel, eps=eps),
        out_shape=jax.ShapeDtypeStruct((rows, d_model), x.dtype),
        grid_spec=pltpu.PrefetchScalarGridSpec(
            num_scalar_prefetch=0,
            grid=grid,
            in_specs=[
                pl.BlockSpec((tm, D), lambda i: (i, 0)),          # x rows
                pl.BlockSpec((D, d_model), lambda i: (0, 0)),     # folded W^T (grid-invariant)
                pl.BlockSpec((1, d_model), lambda i: (0, 0)),     # folded bias (grid-invariant)
            ],
            out_specs=pl.BlockSpec((tm, d_model), lambda i: (i, 0)),
        ),
        compiler_params=pltpu.CompilerParams(
            dimension_semantics=("parallel",),        # shards rows across v7x's 2 TCs
            vmem_limit_bytes=32 * 1024 * 1024,
        ),
    )(x2, w_fold, b_fold)

    return out2.reshape(B, ts_d, seg_num, d_model)


def _reference(x, params, *, win_size, eps=1e-5):
    """Pure-JAX reference matching the PyTorch module (unfolded LN + Linear)."""
    B, ts_d, L, d_model = x.shape
    seg_num = L // win_size
    D = win_size * d_model
    gamma, beta, w, b = params
    xm = x.reshape(B, ts_d, seg_num, D).astype(jnp.float32)
    mean = jnp.mean(xm, axis=-1, keepdims=True)
    var = jnp.mean((xm - mean) ** 2, axis=-1, keepdims=True)
    xh = (xm - mean) * lax.rsqrt(var + eps)
    y = xh * gamma.astype(jnp.float32) + beta.astype(jnp.float32)
    out = y @ w.T.astype(jnp.float32) + b.astype(jnp.float32)
    return out.astype(x.dtype)


if __name__ == "__main__":
    # Small shapes consistent with the module's forward.
    B, ts_d, L, d_model = 2, 4, 8, 32
    win_size = 1  # the reference module's param shapes only admit win_size == 1
    D = win_size * d_model

    key = jax.random.PRNGKey(0)
    k_x, k_g, k_bt, k_w, k_b = jax.random.split(key, 5)

    x = jax.random.normal(k_x, (B, ts_d, L, d_model), dtype=jnp.float32)

    # Deterministic params matching nn.LayerNorm(d_model) / nn.Linear(d_model, d_model).
    gamma = 1.0 + 0.01 * jax.random.normal(k_g, (D,), dtype=jnp.float32)
    beta = 0.01 * jax.random.normal(k_bt, (D,), dtype=jnp.float32)
    w = jax.random.normal(k_w, (d_model, D), dtype=jnp.float32) * (1.0 / jnp.sqrt(D))
    b = 0.01 * jax.random.normal(k_b, (d_model,), dtype=jnp.float32)
    params = (gamma, beta, w, b)

    # 1) Main small test (single-block path).
    out = jax.block_until_ready(seg_merging_new(x, params, win_size=win_size))
    ref = _reference(x, params, win_size=win_size)
    assert out.shape == (B, ts_d, L // win_size, d_model), out.shape
    assert jnp.allclose(out, ref, atol=1e-4, rtol=1e-4), float(jnp.max(jnp.abs(out - ref)))

    # 2) Multi-step grid with a ragged last block (rows = 600, tm = 512).
    B2, t2, L2 = 2, 4, 75
    x_big = jax.random.normal(k_x, (B2, t2, L2, d_model), dtype=jnp.float32)
    out_big = jax.block_until_ready(
        seg_merging_new(x_big, params, win_size=win_size, row_tile=512))
    ref_big = _reference(x_big, params, win_size=win_size)
    assert out_big.shape == (B2, t2, L2, d_model), out_big.shape
    assert jnp.allclose(out_big, ref_big, atol=1e-4, rtol=1e-4), \
        float(jnp.max(jnp.abs(out_big - ref_big)))

    print("KERNEL_OK")
</pallas_src>

<mosaic_0001>
module attributes {stable_mosaic.version = 11 : i64} {
  func.func @_seg_merge_kernel(%arg0: i32, %arg1: memref<64x32xf32, #tpu.memory_space<vmem>>, %arg2: memref<32x32xf32, #tpu.memory_space<vmem>>, %arg3: memref<1x32xf32, #tpu.memory_space<vmem>>, %arg4: memref<64x32xf32, #tpu.memory_space<vmem>>) attributes {dimension_semantics = [#tpu.dimension_semantics<parallel>], iteration_bounds = array<i64: 1>, scalar_prefetch = 0 : i64, scratch_operands = 0 : i64, tpu.core_type = #tpu.core_type<tc>, window_params = [{transform_indices = @transform_0, window_bounds = array<i64: 64, 32>}, {pipeline_mode = #tpu.pipeline_mode<synchronous>, transform_indices = @transform_1, window_bounds = array<i64: 32, 32>}, {pipeline_mode = #tpu.pipeline_mode<synchronous>, transform_indices = @transform_2, window_bounds = array<i64: 1, 32>}, {transform_indices = @transform_3, window_bounds = array<i64: 64, 32>}]} {
    %c0 = arith.constant 0 : index
    %c0_0 = arith.constant 0 : index
    %0 = vector.load %arg1[%c0, %c0_0] : memref<64x32xf32, #tpu.memory_space<vmem>>, vector<64x32xf32>
    %cst = arith.constant dense<0.000000e+00> : vector<64xf32>
    %1 = vector.multi_reduction <add>, %0, %cst [1] : vector<64x32xf32> to vector<64xf32>
    %2 = vector.shape_cast %1 : vector<64xf32> to vector<64x1xf32>
    %cst_1 = arith.constant 3.200000e+01 : f32
    %3 = vector.broadcast %cst_1 : f32 to vector<64x1xf32>
    %4 = arith.divf %2, %3 : vector<64x1xf32>
    %5 = vector.broadcast %4 : vector<64x1xf32> to vector<64x32xf32>
    %6 = arith.subf %0, %5 : vector<64x32xf32>
    %7 = arith.mulf %6, %6 : vector<64x32xf32>
    %cst_2 = arith.constant dense<0.000000e+00> : vector<64xf32>
    %8 = vector.multi_reduction <add>, %7, %cst_2 [1] : vector<64x32xf32> to vector<64xf32>
    %9 = vector.shape_cast %8 : vector<64xf32> to vector<64x1xf32>
    %cst_3 = arith.constant 3.200000e+01 : f32
    %10 = vector.broadcast %cst_3 : f32 to vector<64x1xf32>
    %11 = arith.divf %9, %10 : vector<64x1xf32>
    %cst_4 = arith.constant 9.99999974E-6 : f32
    %12 = vector.broadcast %cst_4 : f32 to vector<64x1xf32>
    %13 = arith.addf %11, %12 : vector<64x1xf32>
    %14 = math.rsqrt %13 : vector<64x1xf32>
    %15 = vector.broadcast %14 : vector<64x1xf32> to vector<64x32xf32>
    %16 = arith.mulf %6, %15 : vector<64x32xf32>
    %c0_5 = arith.constant 0 : index
    %c0_6 = arith.constant 0 : index
    %17 = vector.load %arg2[%c0_5, %c0_6] : memref<32x32xf32, #tpu.memory_space<vmem>>, vector<32x32xf32>
    %cst_7 = arith.constant dense<0.000000e+00> : vector<64x32xf32>
    %18 = tpu.matmul %16, %17, %cst_7 {dimension_numbers = #tpu.dot_dimension_numbers<[1], [0], [0], [1], [0, 0, 1, 1], [], []>} : vector<64x32xf32>, vector<32x32xf32>, vector<64x32xf32> -> vector<64x32xf32>
    %c0_8 = arith.constant 0 : index
    %c0_9 = arith.constant 0 : index
    %19 = vector.load %arg3[%c0_8, %c0_9] : memref<1x32xf32, #tpu.memory_space<vmem>>, vector<1x32xf32>
    %20 = vector.broadcast %19 : vector<1x32xf32> to vector<64x32xf32>
    %21 = arith.addf %18, %20 : vector<64x32xf32>
    %c0_10 = arith.constant 0 : index
    %c0_11 = arith.constant 0 : index
    %22 = vector.load %arg4[%c0_10, %c0_11] : memref<64x32xf32, #tpu.memory_space<vmem>>, vector<64x32xf32>
    tpu.vector_store %arg4[%c0_10, %c0_11], %21 {strides = array<i32>} : memref<64x32xf32, #tpu.memory_space<vmem>>, vector<64x32xf32>,
    return
  }
  func.func @transform_0(%arg0: i32) -> (i32, i32) {
    %c0_i32 = arith.constant 0 : i32
    %c0_i32_0 = arith.constant 0 : i32
    return %arg0, %c0_i32 : i32, i32
  }
  func.func @transform_1(%arg0: i32) -> (i32, i32) {
    %c0_i32 = arith.constant 0 : i32
    %c0_i32_0 = arith.constant 0 : i32
    %c0_i32_1 = arith.constant 0 : i32
    return %c0_i32, %c0_i32_0 : i32, i32
  }
  func.func @transform_2(%arg0: i32) -> (i32, i32) {
    %c0_i32 = arith.constant 0 : i32
    %c0_i32_0 = arith.constant 0 : i32
    %c0_i32_1 = arith.constant 0 : i32
    return %c0_i32, %c0_i32_0 : i32, i32
  }
  func.func @transform_3(%arg0: i32) -> (i32, i32) {
    %c0_i32 = arith.constant 0 : i32
    %c0_i32_0 = arith.constant 0 : i32
    return %arg0, %c0_i32 : i32, i32
  }
}

</mosaic_0001>

<llo_original>
// kernel: tpu_custom_call.1
$region0: #{tpu_custom_call.1}
  #allocation0 [shape = 'u32[]', space=smem, size = 0x4, offset = 0x4, fixed_abs, tag = 'smem constant byte address 0x4 - core index']
  #allocation1 [shape = 'u32[144,128]{1,0:T(1,128)}', space=vmem, size = 0x12000, scoped, tag = 'internal scratch']
  %s0 = inlined_call_operand.vmem [shape: f32[64,32], index: 0, kind: input, shape index: {}]
  %s1 = inlined_call_operand.vmem [shape: f32[32,32], index: 1, kind: input, shape index: {}]
  %s2 = inlined_call_operand.vmem [shape: f32[1,32], index: 2, kind: input, shape index: {}]
  %s3 = inlined_call_operand.vmem [shape: f32[64,32], index: 3, kind: output, shape index: {}]
  %s4 = sld [smem:[#allocation0]]
  $region22: #{tpu_custom_call.1} parent=0
    _
  %s6 = ssub.s32 1, %s4
  %s7 = scalar_select 0, %s6, %s4
  // Predicated region
  $region2: #{tpu_custom_call.1} parent=0 // pred_check
    _
  $region3: #{tpu_custom_call.1} parent=0 // pred_check_branch
    %9 = sbr.rel (0) target = $region5
  $region4: #{tpu_custom_call.1} parent=0 // pred_region
    _
  $region5: #{tpu_custom_call.1} parent=0 // pred_fallthru
    _
  // Predicated region
  $region6: #{tpu_custom_call.1} parent=0 // pred_check
    _
  $region7: #{tpu_custom_call.1} parent=0 // pred_check_branch
    %11 = sbr.rel (0) target = $region9
  $region8: #{tpu_custom_call.1} parent=0 // pred_region
    _
  $region9: #{tpu_custom_call.1} parent=0 // pred_fallthru
    _
  // Predicated region
  $region10: #{tpu_custom_call.1} parent=0 // pred_check
    _
  $region11: #{tpu_custom_call.1} parent=0 // pred_check_branch
    %13 = sbr.rel (0) target = $region13
  $region12: #{tpu_custom_call.1} parent=0 // pred_region
    _
  $region13: #{tpu_custom_call.1} parent=0 // pred_fallthru
    _
  %v14 = vld [vmem:[%s0] sm:$0xff]
  %v15 = vld [vmem:[%s0 + $0x8] sm:$0xff]
  %v16 = vld [vmem:[%s0 + $0x10] sm:$0xff]
  %v17 = vld [vmem:[%s0 + $0x18] sm:$0xff]
  %v18 = vld [vmem:[%s0 + $0x20] sm:$0xff]
  %v19 = vld [vmem:[%s0 + $0x28] sm:$0xff]
  %v20 = vld [vmem:[%s0 + $0x30] sm:$0xff]
  %v21 = vld [vmem:[%s0 + $0x38] sm:$0xff]
  %vm22 = vcmask 261120
  %v23 = vsel %vm22, %v14, 0.0
  %24 = vadd.xlane.f32.xlu0 %v23
  %v25 = vpop.xlane.xlu0 %24
  %v26 = vsel %vm22, %v15, 0.0
  %27 = vadd.xlane.f32.xlu0 %v26
  %v28 = vpop.xlane.xlu0 %27
  %v29 = vsel %vm22, %v16, 0.0
  %30 = vadd.xlane.f32.xlu0 %v29
  %v31 = vpop.xlane.xlu0 %30
  %v32 = vsel %vm22, %v17, 0.0
  %33 = vadd.xlane.f32.xlu0 %v32
  %v34 = vpop.xlane.xlu0 %33
  %v35 = vsel %vm22, %v18, 0.0
  %36 = vadd.xlane.f32.xlu0 %v35
  %v37 = vpop.xlane.xlu0 %36
  %v38 = vsel %vm22, %v19, 0.0
  %39 = vadd.xlane.f32.xlu0 %v38
  %v40 = vpop.xlane.xlu0 %39
  %v41 = vsel %vm22, %v20, 0.0
  %42 = vadd.xlane.f32.xlu0 %v41
  %v43 = vpop.xlane.xlu0 %42
  %v44 = vsel %vm22, %v21, 0.0
  %45 = vadd.xlane.f32.xlu0 %v44
  %v46 = vpop.xlane.xlu0 %45
  %v47 = vrcp.pop 32.0
  %v48 = vmul.f32 %v25, %v47
  %v49 = vmul.f32 %v28, %v47
  %v50 = vmul.f32 %v31, %v47
  %v51 = vmul.f32 %v34, %v47
  %v52 = vmul.f32 %v37, %v47
  %v53 = vmul.f32 %v40, %v47
  %v54 = vmul.f32 %v43, %v47
  %v55 = vmul.f32 %v46, %v47
  %v56 = vsub.f32 %v14, %v48
  %v57 = vsub.f32 %v15, %v49
  %v58 = vsub.f32 %v16, %v50
  %v59 = vsub.f32 %v17, %v51
  %v60 = vsub.f32 %v18, %v52
  %v61 = vsub.f32 %v19, %v53
  %v62 = vsub.f32 %v20, %v54
  %v63 = vsub.f32 %v21, %v55
  %v64 = vmul.f32 %v56, %v56
  %v65 = vmul.f32 %v57, %v57
  %v66 = vmul.f32 %v58, %v58
  %v67 = vmul.f32 %v59, %v59
  %v68 = vmul.f32 %v60, %v60
  %v69 = vmul.f32 %v61, %v61
  %v70 = vmul.f32 %v62, %v62
  %v71 = vmul.f32 %v63, %v63
  %v72 = vsel %vm22, %v64, 0.0
  %73 = vadd.xlane.f32.xlu0 %v72
  %v74 = vpop.xlane.xlu0 %73
  %v75 = vsel %vm22, %v65, 0.0
  %76 = vadd.xlane.f32.xlu0 %v75
  %v77 = vpop.xlane.xlu0 %76
  %v78 = vsel %vm22, %v66, 0.0
  %79 = vadd.xlane.f32.xlu0 %v78
  %v80 = vpop.xlane.xlu0 %79
  %v81 = vsel %vm22, %v67, 0.0
  %82 = vadd.xlane.f32.xlu0 %v81
  %v83 = vpop.xlane.xlu0 %82
  %v84 = vsel %vm22, %v68, 0.0
  %85 = vadd.xlane.f32.xlu0 %v84
  %v86 = vpop.xlane.xlu0 %85
  %v87 = vsel %vm22, %v69, 0.0
  %88 = vadd.xlane.f32.xlu0 %v87
  %v89 = vpop.xlane.xlu0 %88
  %v90 = vsel %vm22, %v70, 0.0
  %91 = vadd.xlane.f32.xlu0 %v90
  %v92 = vpop.xlane.xlu0 %91
  %v93 = vsel %vm22, %v71, 0.0
  %94 = vadd.xlane.f32.xlu0 %v93
  %v95 = vpop.xlane.xlu0 %94
  %v96 = vmul.f32 %v74, %v47
  %v97 = vmul.f32 %v77, %v47
  %v98 = vmul.f32 %v80, %v47
  %v99 = vmul.f32 %v83, %v47
  %v100 = vmul.f32 %v86, %v47
  %v101 = vmul.f32 %v89, %v47
  %v102 = vmul.f32 %v92, %v47
  %v103 = vmul.f32 %v95, %v47
  %v104 = vadd.f32 %v96, 1e-05
  %v105 = vadd.f32 %v97, 1e-05
  %v106 = vadd.f32 %v98, 1e-05
  %v107 = vadd.f32 %v99, 1e-05
  %v108 = vadd.f32 %v100, 1e-05
  %v109 = vadd.f32 %v101, 1e-05
  %v110 = vadd.f32 %v102, 1e-05
  %v111 = vadd.f32 %v103, 1e-05
  %v112 = vrsqrt.pop %v104
  %v113 = vrsqrt.pop %v105
  %v114 = vrsqrt.pop %v106
  %v115 = vrsqrt.pop %v107
  %v116 = vrsqrt.pop %v108
  %v117 = vrsqrt.pop %v109
  %v118 = vrsqrt.pop %v110
  %v119 = vrsqrt.pop %v111
  %v120 = vmul.f32 %v56, %v112
  %v121 = vmul.f32 %v57, %v113
  %v122 = vmul.f32 %v58, %v114
  %v123 = vmul.f32 %v59, %v115
  %v124 = vmul.f32 %v60, %v116
  %v125 = vmul.f32 %v61, %v117
  %v126 = vmul.f32 %v62, %v118
  %v127 = vmul.f32 %v63, %v119
  %v128 = vld [vmem:[%s1] sm:$0xff]
  %v129 = vld [vmem:[%s1 + $0x8] sm:$0xff]
  %v130 = vld [vmem:[%s1 + $0x10] sm:$0xff]
  %v131 = vld [vmem:[%s1 + $0x18] sm:$0xff]
  %v132 = vld [vmem:[%s2] sm:$0x1]
  %v134 = vlaneseq
  %v135 = vshrl.u32 %v134, 7
  %v136 = vsub.s32 0, %v135
  %v137 = vrot.slane %v132, %v136
  %v140 = vsel %vm22, %v120, 0
  %v143 = vsel %vm22, %v121, 0
  %v146 = vsel %vm22, %v122, 0
  %v149 = vsel %vm22, %v123, 0
  %v152 = vsel %vm22, %v124, 0
  %v155 = vsel %vm22, %v125, 0
  %v158 = vsel %vm22, %v126, 0
  %v161 = vsel %vm22, %v127, 0
  %163 = vmatprep.subr.mxu0 0.0
  %164 = vmatpush1.msra.mxu0 %v128
  %165 = vmatprep.subr.mxu0 0.0
  %166 = vmatpush1.msra.mxu0 %v129
  %167 = vmatprep.subr.mxu0 0.0
  %168 = vmatpush1.msra.mxu0 %v130
  %169 = vmatprep.subr.mxu0 0.0
  %170 = vmatpush1.msra.mxu0 %v131
  %171 = vmatprep.subr.mxu0 0.0
  %172 = vmatpush1.msra.mxu0 0.0
  %173 = vmatprep.subr.mxu0 0.0
  %174 = vmatpush1.msra.mxu0 0.0
  %175 = vmatprep.subr.mxu0 0.0
  %176 = vmatpush1.msra.mxu0 0.0
  %177 = vmatprep.subr.mxu0 0.0
  %178 = vmatpush1.msra.mxu0 0.0
  %179 = vmatprep.subr.mxu0 0.0
  %180 = vmatpush1.msra.mxu0 0.0
  %181 = vmatprep.subr.mxu0 0.0
  %182 = vmatpush1.msra.mxu0 0.0
  %183 = vmatprep.subr.mxu0 0.0
  %184 = vmatpush1.msra.mxu0 0.0
  %185 = vmatprep.subr.mxu0 0.0
  %186 = vmatpush1.msra.mxu0 0.0
  %187 = vmatprep.subr.mxu0 0.0
  %188 = vmatpush1.msra.mxu0 0.0
  %189 = vmatprep.subr.mxu0 0.0
  %190 = vmatpush1.msra.mxu0 0.0
  %191 = vmatprep.subr.mxu0 0.0
  %192 = vmatpush1.msra.mxu0 0.0
  %193 = vmatprep.subr.mxu0 0.0
  %194 = vmatpush1.msra.mxu0 0.0
  %195 = vmatprep.subr.mxu0 0.0
  %196 = vmatpush1.msra.mxu0 0.0
  %197 = vmatprep.subr.mxu0 0.0
  %198 = vmatpush1.msra.mxu0 0.0
  %199 = vmatprep.subr.mxu0 0.0
  %200 = vmatpush1.msra.mxu0 0.0
  %201 = vmatprep.subr.mxu0 0.0
  %202 = vmatpush1.msra.mxu0 0.0
  %203 = vmatprep.subr.mxu0 0.0
  %204 = vmatpush1.msra.mxu0 0.0
  %205 = vmatprep.subr.mxu0 0.0
  %206 = vmatpush1.msra.mxu0 0.0
  %207 = vmatprep.subr.mxu0 0.0
  %208 = vmatpush1.msra.mxu0 0.0
  %209 = vmatprep.subr.mxu0 0.0
  %210 = vmatpush1.msra.mxu0 0.0
  %211 = vmatprep.subr.mxu0 0.0
  %212 = vmatpush1.msra.mxu0 0.0
  %213 = vmatprep.subr.mxu0 0.0
  %214 = vmatpush1.msra.mxu0 0.0
  %215 = vmatprep.subr.mxu0 0.0
  %216 = vmatpush1.msra.mxu0 0.0
  %217 = vmatprep.subr.mxu0 0.0
  %218 = vmatpush1.msra.mxu0 0.0
  %219 = vmatprep.subr.mxu0 0.0
  %220 = vmatpush1.msra.mxu0 0.0
  %221 = vmatprep.subr.mxu0 0.0
  %222 = vmatpush1.msra.mxu0 0.0
  %223 = vmatprep.subr.mxu0 0.0
  %224 = vmatpush1.msra.mxu0 0.0
  %225 = vmatprep.subr.mxu0 0.0
  %226 = vmatpush1.msra.mxu0 0.0
  %227 = vmatprep.mubr.f32.mxu0 0.0
  %228 = vmatmul.mubr.f32.gmra.mrb[0].mxu0 %v140
  %v229 = vpop.f32.mrb[0].mxu0
  %v230 = vadd.f32 %v137, %v229
  %v231 = vpop.f32.mrb[0].mxu0
  %232 = vmatprep.mubr.f32.mxu0 0.0
  %233 = vmatmul.mubr.f32.gmra.mrb[0].mxu0 %v143
  %v234 = vpop.f32.mrb[0].mxu0
  %v235 = vadd.f32 %v137, %v234
  %v236 = vpop.f32.mrb[0].mxu0
  %237 = vmatprep.mubr.f32.mxu0 0.0
  %238 = vmatmul.mubr.f32.gmra.mrb[0].mxu0 %v146
  %v239 = vpop.f32.mrb[0].mxu0
  %v240 = vadd.f32 %v137, %v239
  %v241 = vpop.f32.mrb[0].mxu0
  %242 = vmatprep.mubr.f32.mxu0 0.0
  %243 = vmatmul.mubr.f32.gmra.mrb[0].mxu0 %v149
  %v244 = vpop.f32.mrb[0].mxu0
  %v245 = vadd.f32 %v137, %v244
  %v246 = vpop.f32.mrb[0].mxu0
  %247 = vmatprep.mubr.f32.mxu0 0.0
  %248 = vmatmul.mubr.f32.gmra.mrb[0].mxu0 %v152
  %v249 = vpop.f32.mrb[0].mxu0
  %v250 = vadd.f32 %v137, %v249
  %v251 = vpop.f32.mrb[0].mxu0
  %252 = vmatprep.mubr.f32.mxu0 0.0
  %253 = vmatmul.mubr.f32.gmra.mrb[0].mxu0 %v155
  %v254 = vpop.f32.mrb[0].mxu0
  %v255 = vadd.f32 %v137, %v254
  %v256 = vpop.f32.mrb[0].mxu0
  %257 = vmatprep.mubr.f32.mxu0 0.0
  %258 = vmatmul.mubr.f32.gmra.mrb[0].mxu0 %v158
  %v259 = vpop.f32.mrb[0].mxu0
  %v260 = vadd.f32 %v137, %v259
  %v261 = vpop.f32.mrb[0].mxu0
  %262 = vmatprep.mubr.f32.mxu0 0.0
  %263 = vmatmul.mubr.f32.gmra.mrb[0].mxu0 %v161
  %v264 = vpop.f32.mrb[0].mxu0
  %v265 = vadd.f32 %v137, %v264
  %v266 = vpop.f32.mrb[0].mxu0
  %267 = vdwg.mxu0
  %268 = vst.msk [vmem:[%s3] sm:$0xff] %vm22, %v230
  %269 = vst.msk [vmem:[%s3 + $0x8] sm:$0xff] %vm22, %v235
  %270 = vst.msk [vmem:[%s3 + $0x10] sm:$0xff] %vm22, %v240
  %271 = vst.msk [vmem:[%s3 + $0x18] sm:$0xff] %vm22, %v245
  %272 = vst.msk [vmem:[%s3 + $0x20] sm:$0xff] %vm22, %v250
  %273 = vst.msk [vmem:[%s3 + $0x28] sm:$0xff] %vm22, %v255
  %274 = vst.msk [vmem:[%s3 + $0x30] sm:$0xff] %vm22, %v260
  %275 = vst.msk [vmem:[%s3 + $0x38] sm:$0xff] %vm22, %v265
  // Predicated region
  $region14: #{tpu_custom_call.1} parent=0 // pred_check
    _
  $region15: #{tpu_custom_call.1} parent=0 // pred_check_branch
    %277 = sbr.rel (0) target = $region17
  $region16: #{tpu_custom_call.1} parent=0 // pred_region
    _
  $region17: #{tpu_custom_call.1} parent=0 // pred_fallthru
    _
  // Predicated region
  $region18: #{tpu_custom_call.1} parent=0 // pred_check
    _
  $region19: #{tpu_custom_call.1} parent=0 // pred_check_branch
    %279 = sbr.rel (0) target = $region21
  $region20: #{tpu_custom_call.1} parent=0 // pred_region
    _
  $region21: #{tpu_custom_call.1} parent=0 // pred_fallthru
    _

</llo_original>
